<compile_context>
chip_gen: v7x
topology: tpu7x:2x2x1
jax: 0.10.0
libtpu: 0.0.40
codegen_flags: <defaults>
</compile_context>

<pallas_src>
import jax
import jax.numpy as jnp
from jax import lax
from jax.experimental import pallas as pl
from jax.experimental.pallas import tpu as pltpu


def _ceil_div(a, b):
    return -(-a // b)


def _valid_tile_cs(c):
    """C-tile sizes valid as the output's lane dim: C itself, plus any
    multiple-of-128 divisor of C, in descending order."""
    cands = [c]
    t = (c // 128) * 128
    while t >= 128:
        if t != c and c % t == 0:
            cands.append(t)
        t -= 128
    return cands


def _choose_tiles(n, c, s, itemsize, budget):
    """Pick (tile_c, tile_s) for the (N, C, S) input so one block is <= budget bytes.

    Preference order:
      1. whole array in one block,
      2. tile C only (full-S contiguous DMA rows, C becomes a parallel grid axis),
      3. smallest valid C tile + lane-aligned S tiling.
    """
    if n * c * s * itemsize <= budget:
        return c, s
    cands = _valid_tile_cs(c)
    for tc in cands:                       # largest C tile whose full-S block fits
        if n * tc * s * itemsize <= budget:
            return tc, s
    tc = cands[-1]                         # smallest valid C tile; now tile S too
    ts = (budget // max(n * tc * itemsize, 1)) // 128 * 128
    ts = min(s, max(128, ts))
    return tc, ts


def _make_pool_kernel(num_s, s_tiles_per_p, rem):
    """Global-sum pool over the streamed S axis into an f32 (N, tile_c) block."""

    def kernel(x_ref, o_ref):
        # x_ref: (N, tile_c, tile_s) input tile
        # o_ref: (N, tile_c) float32 partial sums (resident across the S axis)
        p = pl.program_id(0)
        si = pl.program_id(2)
        g = p * s_tiles_per_p + si          # global S-tile index for this step

        @pl.when(si == 0)
        def _init():
            o_ref[...] = jnp.zeros_like(o_ref)

        def _acc(vals):
            # f32-accumulating reduction; no tile-sized f32 copy of the input
            # (budget leaves headroom even if the convert materializes per-tile).
            o_ref[...] += jnp.sum(vals, axis=-1, dtype=jnp.float32)

        if rem == 0:
            @pl.when(g < num_s)             # skip padded steps of an uneven P split
            def _full():
                _acc(x_ref[...])
        else:
            @pl.when(g < num_s - 1)         # unmasked fast path for all full tiles
            def _full():
                _acc(x_ref[...])

            @pl.when(g == num_s - 1)        # ragged final tile: mask here only
            def _masked():
                x = x_ref[...]
                lane = lax.broadcasted_iota(jnp.int32, x.shape, dimension=2)
                _acc(jnp.where(lane < rem, x, jnp.zeros_like(x)))

    return kernel


def _make_fc_kernel(p_split, inv_s):
    """Tiny finalize: mean-scale pooled sums, (N,C)x(C,K) MXU matmul + bias."""

    def kernel(p_ref, w_ref, b_ref, o_ref):
        # p_ref: (P, N, C) f32 partials; w_ref: (C, K); b_ref: (1, K); o_ref: (N, K)
        pooled = p_ref[0]
        for i in range(1, p_split):
            pooled = pooled + p_ref[i]
        pooled = pooled * jnp.float32(inv_s)                  # (N, C) global mean, f32
        w = w_ref[...]
        # Cast the small pooled activations to w's dtype instead of upcasting W;
        # the MXU still accumulates in f32 via preferred_element_type.
        logits = jnp.dot(pooled.astype(w.dtype), w,
                         preferred_element_type=jnp.float32)  # (N, K)
        o_ref[...] = (logits + b_ref[...].astype(jnp.float32)).astype(o_ref.dtype)

    return kernel


def cls_reg_head(feature_maps, weight, bias, *,
                 target_tile_bytes: int = 8 * 1024 * 1024):
    """ClsRegHead forward.

    feature_maps: list/tuple of NCDHW arrays (only the last is used).
    weight: (num_classes, in_channels)  -- nn.Linear.weight layout
    bias:   (num_classes,)              -- nn.Linear.bias
    Returns: (N, num_classes) in the input dtype.

    target_tile_bytes: per-input-buffer VMEM budget for the streamed pooling
    kernel.  8 MiB is safe on every generation; on v5e/v6e (128 MiB VMEM)
    16-32 MiB cuts per-step overhead further; on v7x (64 MiB VMEM) keep <=~12 MiB.
    """
    x = feature_maps[-1]                               # (N, C, D, H, W)
    n, c = int(x.shape[0]), int(x.shape[1])
    s = 1
    for dim in x.shape[2:]:
        s *= int(dim)
    x3 = x.reshape(n, c, s)                            # (N, C, S): layout-free reshape
    w_t = weight.T                                     # (C, K)
    k = int(w_t.shape[1])
    b2 = bias.reshape(1, k)

    itemsize = jnp.dtype(x.dtype).itemsize
    total_bytes = n * c * s * itemsize
    tile_c, tile_s = _choose_tiles(n, c, s, itemsize, target_tile_bytes)
    num_c = c // tile_c
    num_s = _ceil_div(s, tile_s)
    rem = s % tile_s

    # v7x dual-TensorCore: ensure some 'parallel' grid axis has >= 2 entries for
    # non-trivial inputs.  Harmless (just sequential tiles) on single-TC v5e/v6e.
    # TODO(synk): generalize the parallel split count if future chips have >2 cores.
    if num_c == 1 and num_s == 1 and total_bytes > (4 << 20) and c % 256 == 0:
        tile_c = c // 2
        num_c = 2
    p_split = 2 if (num_c == 1 and num_s >= 2) else 1
    s_tiles_per_p = _ceil_div(num_s, p_split)

    # Honest VMEM accounting: double-buffered input blocks + output blocks + margin.
    in_block_bytes = n * tile_c * tile_s * itemsize
    out_block_bytes = n * tile_c * 4
    vmem_limit = max(32 * 1024 * 1024,
                     2 * in_block_bytes + 2 * out_block_bytes + (2 << 20))

    pool_kernel = _make_pool_kernel(num_s, s_tiles_per_p, rem)

    def x_index_map(p, ci, si):
        # Clamp so padded steps of an uneven P split stay in bounds; their
        # contribution is skipped inside the kernel.
        g = jnp.minimum(p * s_tiles_per_p + si, num_s - 1)
        return (0, ci, g)

    partials = pl.pallas_call(
        pool_kernel,
        out_shape=jax.ShapeDtypeStruct((p_split, n, c), jnp.float32),
        grid_spec=pltpu.PrefetchScalarGridSpec(
            num_scalar_prefetch=0,
            grid=(p_split, num_c, s_tiles_per_p),
            in_specs=[
                # Streamed input: double-buffered by Pallas; full-S rows whenever
                # the budget allows (long contiguous HBM runs).
                pl.BlockSpec((n, tile_c, tile_s), x_index_map),
            ],
            # Leading dim squeezed: each (p, ci) owns one resident (N, tile_c)
            # f32 accumulator block across the S reduction axis.
            out_specs=pl.BlockSpec((None, n, tile_c),
                                   lambda p, ci, si: (p, 0, ci)),
        ),
        compiler_params=pltpu.CompilerParams(
            dimension_semantics=("parallel", "parallel", "arbitrary"),
            vmem_limit_bytes=vmem_limit,
        ),
        cost_estimate=pl.CostEstimate(
            flops=n * c * s,
            transcendentals=0,
            bytes_accessed=total_bytes + p_split * n * c * 4,
        ),
    )(x3)

    # Tiny FC finalize: one invocation, whole-array blocks (no streamed weights,
    # so no double-buffered W VMEM).
    fc_kernel = _make_fc_kernel(p_split, 1.0 / float(s))
    out = pl.pallas_call(
        fc_kernel,
        out_shape=jax.ShapeDtypeStruct((n, k), x.dtype),
    )(partials, w_t, b2)
    return out


def _reference(feature_maps, weight, bias):
    x = feature_maps[-1]
    n, c = x.shape[0], x.shape[1]
    pooled = jnp.mean(x.reshape(n, c, -1).astype(jnp.float32), axis=-1)
    return pooled @ weight.T.astype(jnp.float32) + bias.astype(jnp.float32)


if __name__ == "__main__":
    key = jax.random.PRNGKey(0)
    k_x0, k_x1, k_w, k_b, k_x2, k_xw, k_w3 = jax.random.split(key, 7)

    batch, in_channels, num_classes = 2, 32, 8
    d = h = w = 4

    # The module's forward accepts a list of feature maps and uses the last.
    x0 = jax.random.normal(k_x0, (batch, in_channels, d, h, w), dtype=jnp.float32)
    x1 = jax.random.normal(k_x1, (batch, in_channels, d, h, w), dtype=jnp.float32)
    feature_maps = [x0, x1]

    limit = 1.0 / (in_channels ** 0.5)
    weight = jax.random.uniform(k_w, (num_classes, in_channels),
                                minval=-limit, maxval=limit, dtype=jnp.float32)
    bias = jax.random.uniform(k_b, (num_classes,),
                              minval=-limit, maxval=limit, dtype=jnp.float32)

    # Case 1: small feature map -> single-block path (grid (1, 1, 1)).
    out = jax.block_until_ready(cls_reg_head(feature_maps, weight, bias))
    ref = _reference(feature_maps, weight, bias)
    assert out.shape == (batch, num_classes)
    assert jnp.allclose(out, ref, atol=1e-5, rtol=1e-5), "mismatch vs reference (case 1)"

    # Case 2: larger spatial extent + tiny tile budget -> S-tiled reduction with a
    # size-2 parallel split of the S range and a masked ragged final tile.
    x2 = jax.random.normal(k_x2, (batch, in_channels, 4, 4, 12), dtype=jnp.float32)
    out2 = jax.block_until_ready(
        cls_reg_head([x0, x2], weight, bias,
                     target_tile_bytes=batch * in_channels * 128 * 4))
    ref2 = _reference([x0, x2], weight, bias)
    assert out2.shape == (batch, num_classes)
    assert jnp.allclose(out2, ref2, atol=1e-5, rtol=1e-5), "mismatch vs reference (case 2)"

    # Case 3: wider channel dim + small budget -> C-tiled ('parallel') path with
    # full-S contiguous DMA rows (tile_c = 128, two C blocks).
    wide_c = 256
    x_wide = jax.random.normal(k_xw, (batch, wide_c, d, h, w), dtype=jnp.float32)
    limit3 = 1.0 / (wide_c ** 0.5)
    weight3 = jax.random.uniform(k_w3, (num_classes, wide_c),
                                 minval=-limit3, maxval=limit3, dtype=jnp.float32)
    out3 = jax.block_until_ready(
        cls_reg_head([x_wide], weight3, bias, target_tile_bytes=70 * 1024))
    ref3 = _reference([x_wide], weight3, bias)
    assert out3.shape == (batch, num_classes)
    assert jnp.allclose(out3, ref3, atol=1e-5, rtol=1e-5), "mismatch vs reference (case 3)"

    print("KERNEL_OK")
</pallas_src>

<mosaic_0001>
module attributes {stable_mosaic.version = 11 : i64} {
  func.func @kernel(%arg0: i32, %arg1: i32, %arg2: i32, %arg3: memref<2x32x64xf32, #tpu.memory_space<vmem>>, %arg4: memref<1x2x32xf32, #tpu.memory_space<vmem>>) attributes {dimension_semantics = [#tpu.dimension_semantics<parallel>, #tpu.dimension_semantics<parallel>, #tpu.dimension_semantics<arbitrary>], iteration_bounds = array<i64: 1, 1, 1>, scalar_prefetch = 0 : i64, scratch_operands = 0 : i64, tpu.core_type = #tpu.core_type<tc>, window_params = [{transform_indices = @transform_0, window_bounds = array<i64: 2, 32, 64>}, {transform_indices = @transform_1, window_bounds = array<i64: 1, 2, 32>}]} {
    %c1_i32 = arith.constant 1 : i32
    %0 = arith.muli %arg0, %c1_i32 : i32
    %1 = arith.addi %0, %arg2 : i32
    %c0_i32 = arith.constant 0 : i32
    %2 = arith.cmpi eq, %arg2, %c0_i32 : i32
    %3 = arith.extui %2 : i1 to i32
    %c0_i32_0 = arith.constant 0 : i32
    %4 = arith.cmpi ne, %3, %c0_i32_0 : i32
    scf.if %4 {
      %cst = arith.constant 0.000000e+00 : f32
      %8 = vector.broadcast %cst : f32 to vector<2x32xf32>
      %c0 = arith.constant 0 : index
      %c0_3 = arith.constant 0 : index
      %c0_4 = arith.constant 0 : index
      %9 = vector.load %arg4[%c0, %c0_3, %c0_4] : memref<1x2x32xf32, #tpu.memory_space<vmem>>, vector<1x2x32xf32>
      %10 = vector.shape_cast %9 : vector<1x2x32xf32> to vector<2x32xf32>
      %11 = vector.shape_cast %8 : vector<2x32xf32> to vector<1x2x32xf32>
      tpu.vector_store %arg4[%c0, %c0_3, %c0_4], %11 {strides = array<i32>} : memref<1x2x32xf32, #tpu.memory_space<vmem>>, vector<1x2x32xf32>,
    } else {
    }
    %c1_i32_1 = arith.constant 1 : i32
    %5 = arith.cmpi slt, %1, %c1_i32_1 : i32
    %6 = arith.extui %5 : i1 to i32
    %c0_i32_2 = arith.constant 0 : i32
    %7 = arith.cmpi ne, %6, %c0_i32_2 : i32
    scf.if %7 {
      %c0 = arith.constant 0 : index
      %c0_3 = arith.constant 0 : index
      %c0_4 = arith.constant 0 : index
      %8 = vector.load %arg3[%c0, %c0_3, %c0_4] : memref<2x32x64xf32, #tpu.memory_space<vmem>>, vector<2x32x64xf32>
      %c0_5 = arith.constant 0 : index
      %c0_6 = arith.constant 0 : index
      %c0_7 = arith.constant 0 : index
      %9 = vector.load %arg4[%c0_5, %c0_6, %c0_7] : memref<1x2x32xf32, #tpu.memory_space<vmem>>, vector<1x2x32xf32>
      %10 = vector.shape_cast %9 : vector<1x2x32xf32> to vector<2x32xf32>
      %cst = arith.constant dense<0.000000e+00> : vector<2x32xf32>
      %11 = vector.multi_reduction <add>, %8, %cst [2] : vector<2x32x64xf32> to vector<2x32xf32>
      %12 = arith.addf %10, %11 : vector<2x32xf32>
      %c0_8 = arith.constant 0 : index
      %c0_9 = arith.constant 0 : index
      %c0_10 = arith.constant 0 : index
      %13 = vector.load %arg4[%c0_8, %c0_9, %c0_10] : memref<1x2x32xf32, #tpu.memory_space<vmem>>, vector<1x2x32xf32>
      %14 = vector.shape_cast %13 : vector<1x2x32xf32> to vector<2x32xf32>
      %15 = vector.shape_cast %12 : vector<2x32xf32> to vector<1x2x32xf32>
      tpu.vector_store %arg4[%c0_8, %c0_9, %c0_10], %15 {strides = array<i32>} : memref<1x2x32xf32, #tpu.memory_space<vmem>>, vector<1x2x32xf32>,
    } else {
    }
    return
  }
  func.func @transform_0(%arg0: i32, %arg1: i32, %arg2: i32) -> (i32, i32, i32) {
    %c1_i32 = arith.constant 1 : i32
    %0 = arith.muli %arg0, %c1_i32 : i32
    %1 = arith.addi %0, %arg2 : i32
    %c0_i32 = arith.constant 0 : i32
    %2 = arith.minsi %1, %c0_i32 : i32
    %c0_i32_0 = arith.constant 0 : i32
    %c0_i32_1 = arith.constant 0 : i32
    return %c0_i32_0, %arg1, %2 : i32, i32, i32
  }
  func.func @transform_1(%arg0: i32, %arg1: i32, %arg2: i32) -> (i32, i32, i32) {
    %c0_i32 = arith.constant 0 : i32
    %c0_i32_0 = arith.constant 0 : i32
    return %arg0, %c0_i32, %arg1 : i32, i32, i32
  }
}

</mosaic_0001>

<llo_original>
// kernel: tpu_custom_call.1
$region0: #{tpu_custom_call.1}
  #allocation0 [shape = 'u32[]', space=smem, size = 0x4, offset = 0x4, fixed_abs, tag = 'smem constant byte address 0x4 - core index']
  #allocation1 [shape = 'u32[144,128]{1,0:T(1,128)}', space=vmem, size = 0x12000, scoped, tag = 'internal scratch']
  %s0 = inlined_call_operand.hbm [shape: f32[2,32,64], index: 0, kind: input, shape index: {}]
  %s1 = inlined_call_operand.hbm [shape: f32[1,2,32], index: 1, kind: output, shape index: {}]
  %s2 = sld [smem:[#allocation0]]
  $region26: #{tpu_custom_call.1} parent=0
    _
  %s4 = ssub.s32 1, %s2
  %s5 = scalar_select 0, %s4, %s2
  $region1: #{tpu_custom_call.1} parent=0
    #allocation2 [shape = 'u8[32768]{0}', space=vmem, size = 0x8000, scoped, tag = 'input window, operand 0, single buffered']
    #allocation3 [shape = 's32[1]{0}', space=sflag, size = 0x4, scoped, tag = 'scoped memory for tpu_custom_call.1']
    #allocation4 [shape = 's32[1]{0}', space=sflag, size = 0x4, scoped, tag = 'scoped memory for tpu_custom_call.1']
    #allocation5 [shape = 'u8[1024]{0}', space=vmem, size = 0x400, scoped, tag = 'output window, operand 0, single buffered']
    %6 = vsyncpa [#allocation3], 0
    %7 = vsyncpa [#allocation4], 0
    // Predicated region
    $region2: #{tpu_custom_call.1} parent=1 // pred_check
      _
    $region3: #{tpu_custom_call.1} parent=1 // pred_check_branch
      %9 = sbr.rel (0) target = $region5
    $region4: #{tpu_custom_call.1} parent=1 // pred_region
      %s10 = sadd.s32 0, 0
      %p11 = scmp.lt.s32.totalorder %s10, 0
      %s12 = scalar_select %p11, %s10, 0
      %s14 = ssub.s32 1024, 1024
      %15 = vsyncadd [#allocation3], %s14
      %s16 = smul.addr %s12, 128
      %s17 = scalar_lea.hbm %s0, %s16
      %s18 = sshll.u32 [#allocation2], 4
      %s19 = int_to_ptr.vmem [resolvable:$true] %s18
      %24 = dma.hbm_to_vmem [thread:$0]  %s17, 1024, %s19, [#allocation3], 128, 128, 8
    $region5: #{tpu_custom_call.1} parent=1 // pred_fallthru
      _
    // Predicated region
    $region6: #{tpu_custom_call.1} parent=1 // pred_check
      _
    $region7: #{tpu_custom_call.1} parent=1 // pred_check_branch
      %26 = sbr.rel (0) target = $region9
    $region8: #{tpu_custom_call.1} parent=1 // pred_region
      %27 = dma.done [#allocation3], 1024
    $region9: #{tpu_custom_call.1} parent=1 // pred_fallthru
      _
    %s28 = sadd.s32 0, 0
    %p29 = scmp.lt.s32.totalorder %s28, 0
    %s30 = scalar_select %p29, %s28, 0
    %s31 = sadd.s32 0, 0
    %p32 = scmp.eq.s32.totalorder 0, 0
    // Predicated region
    $region10: #{tpu_custom_call.1} parent=1 // pred_check
      %p33 = pneg %p32
    $region11: #{tpu_custom_call.1} parent=1 // pred_check_branch
      %35 = sbr.rel (%p33) target = $region13
    $region12: #{tpu_custom_call.1} parent=1 // pred_region
      %vm36 = vcmask 254976
      %37 = vst.msk [vmem:[#allocation5] sm:$0x3] %vm36, 0.0
    $region13: #{tpu_custom_call.1} parent=1 // pred_fallthru
      _
    %p38 = scmp.lt.s32.totalorder %s31, 1
    // Predicated region
    $region14: #{tpu_custom_call.1} parent=1 // pred_check
      %p39 = pneg %p38
    $region15: #{tpu_custom_call.1} parent=1 // pred_check_branch
      %41 = sbr.rel (%p39) target = $region17
    $region16: #{tpu_custom_call.1} parent=1 // pred_region
      %v42 = vld [vmem:[#allocation2] sm:$0xff]
      %v43 = vld [vmem:[#allocation2 + $0x8] sm:$0xff]
      %v44 = vld [vmem:[#allocation2 + $0x10] sm:$0xff]
      %v45 = vld [vmem:[#allocation2 + $0x18] sm:$0xff]
      %v46 = vld [vmem:[#allocation2 + $0x20] sm:$0xff]
      %v47 = vld [vmem:[#allocation2 + $0x28] sm:$0xff]
      %v48 = vld [vmem:[#allocation2 + $0x30] sm:$0xff]
      %v49 = vld [vmem:[#allocation2 + $0x38] sm:$0xff]
      %v50 = vld [vmem:[#allocation5] sm:$0x3]
      %vm51 = vcmask 523264
      %v52 = vsel %vm51, %v42, 0.0
      %53 = vadd.xlane.f32.xlu0 %v52
      %v54 = vpop.xlane.xlu0 %53
      %v55 = vsel %vm51, %v43, 0.0
      %56 = vadd.xlane.f32.xlu0 %v55
      %v57 = vpop.xlane.xlu0 %56
      %v58 = vsel %vm51, %v44, 0.0
      %59 = vadd.xlane.f32.xlu0 %v58
      %v60 = vpop.xlane.xlu0 %59
      %v61 = vsel %vm51, %v45, 0.0
      %62 = vadd.xlane.f32.xlu0 %v61
      %v63 = vpop.xlane.xlu0 %62
      %v64 = vsel %vm51, %v46, 0.0
      %65 = vadd.xlane.f32.xlu0 %v64
      %v66 = vpop.xlane.xlu0 %65
      %v67 = vsel %vm51, %v47, 0.0
      %68 = vadd.xlane.f32.xlu0 %v67
      %v69 = vpop.xlane.xlu0 %68
      %v70 = vsel %vm51, %v48, 0.0
      %71 = vadd.xlane.f32.xlu0 %v70
      %v72 = vpop.xlane.xlu0 %71
      %v73 = vsel %vm51, %v49, 0.0
      %74 = vadd.xlane.f32.xlu0 %v73
      %v75 = vpop.xlane.xlu0 %74
      %v84 = vlaneseq
      %v85 = vand.u32 %v84, 127
      %v86 = vlaneseq
      %v87 = vshrl.u32 %v86, 7
      %v88 = vsub.s32 %v85, %v87
      %v89 = vrot.slane %v54, %v88
      %v90 = vadd.s32 %v85, 4294967288
      %v91 = vlaneseq
      %v92 = vshrl.u32 %v91, 7
      %v93 = vsub.s32 %v90, %v92
      %v94 = vrot.slane %v57, %v93
      %vm95 = vcmask 130112
      %v96 = vsel %vm95, %v94, %v89
      %v97 = vadd.s32 %v85, 4294967280
      %v98 = vlaneseq
      %v99 = vshrl.u32 %v98, 7
      %v100 = vsub.s32 %v97, %v99
      %v101 = vrot.slane %v60, %v100
      %vm102 = vcmask 195712
      %v103 = vsel %vm102, %v101, %v96
      %v104 = vadd.s32 %v85, 4294967272
      %v105 = vlaneseq
      %v106 = vshrl.u32 %v105, 7
      %v107 = vsub.s32 %v104, %v106
      %v108 = vrot.slane %v63, %v107
      %vm109 = vcmask 261312
      %v110 = vsel %vm109, %v108, %v103
      %v111 = vlaneseq
      %v112 = vshrl.u32 %v111, 7
      %v113 = vsub.s32 %v85, %v112
      %v114 = vrot.slane %v66, %v113
      %v115 = vlaneseq
      %v116 = vshrl.u32 %v115, 7
      %v117 = vsub.s32 %v90, %v116
      %v118 = vrot.slane %v69, %v117
      %v119 = vsel %vm95, %v118, %v114
      %v120 = vlaneseq
      %v121 = vshrl.u32 %v120, 7
      %v122 = vsub.s32 %v97, %v121
      %v123 = vrot.slane %v72, %v122
      %v124 = vsel %vm102, %v123, %v119
      %v125 = vlaneseq
      %v126 = vshrl.u32 %v125, 7
      %v127 = vsub.s32 %v104, %v126
      %v128 = vrot.slane %v75, %v127
      %v129 = vsel %vm109, %v128, %v124
      %vm130 = vcmask 1041409
      %v131 = vsel %vm130, %v129, %v110
      %v133 = vadd.f32 %v50, %v131
      %vm134 = vcmask 254976
      %135 = vst.msk [vmem:[#allocation5] sm:$0x3] %vm134, %v133
    $region17: #{tpu_custom_call.1} parent=1 // pred_fallthru
      _
    // Predicated region
    $region18: #{tpu_custom_call.1} parent=1 // pred_check
      _
    $region19: #{tpu_custom_call.1} parent=1 // pred_check_branch
      %137 = sbr.rel (0) target = $region21
    $region20: #{tpu_custom_call.1} parent=1 // pred_region
      %s139 = ssub.s32 32, 32
      %140 = vsyncadd [#allocation4], %s139
      %s142 = sshll.u32 [#allocation5], 4
      %s143 = int_to_ptr.vmem [resolvable:$true] %s142
      %145 = dma.vmem_to_hbm [thread:$0]  %s143, 32, %s1, [#allocation4]
    $region21: #{tpu_custom_call.1} parent=1 // pred_fallthru
      _
    // Predicated region
    $region22: #{tpu_custom_call.1} parent=1 // pred_check
      _
    $region23: #{tpu_custom_call.1} parent=1 // pred_check_branch
      %147 = sbr.rel (0) target = $region25
    $region24: #{tpu_custom_call.1} parent=1 // pred_region
      %148 = dma.done [#allocation4], 32
    $region25: #{tpu_custom_call.1} parent=1 // pred_fallthru
      _
    %149 = vsyncpa [#allocation3], 1
    %150 = vsyncpa [#allocation4], 1

</llo_original>
